<compile_context>
chip_gen: v7x
topology: tpu7x:2x2x1
jax: 0.10.0
libtpu: 0.0.40
codegen_flags: <defaults>
</compile_context>

<pallas_src>
import jax
import jax.numpy as jnp
from jax.experimental import pallas as pl
from jax.experimental.pallas import tpu as pltpu


def _round_up(n, m):
    return ((n + m - 1) // m) * m


def mlp_softmax_kernel(x_ref, w1_ref, b1_ref, w2_ref, b2_ref, w3_ref, b3_ref, o_ref):
    # Compute in f32 regardless of storage dtype (bf16 inputs/weights supported).
    x = x_ref[...].astype(jnp.float32)

    # Linear(num_inputs, 5) + ReLU
    h1 = jnp.dot(x, w1_ref[...].astype(jnp.float32),
                 preferred_element_type=jnp.float32) + b1_ref[...].astype(jnp.float32)
    h1 = jnp.maximum(h1, 0.0)

    # Linear(5, 20) + ReLU
    h2 = jnp.dot(h1, w2_ref[...].astype(jnp.float32),
                 preferred_element_type=jnp.float32) + b2_ref[...].astype(jnp.float32)
    h2 = jnp.maximum(h2, 0.0)

    # Linear(20, num_classes)
    logits = jnp.dot(h2, w3_ref[...].astype(jnp.float32),
                     preferred_element_type=jnp.float32) + b3_ref[...].astype(jnp.float32)

    # Dropout(p=0.3): identity in eval mode.
    # TODO(synk): training-mode dropout (random mask + 1/(1-p) scaling) not emitted.

    # Softmax(dim=1), numerically stable. Class dim is unpadded (tb, num_classes);
    # the reductions handle the physical lane padding internally.
    m = jnp.max(logits, axis=1, keepdims=True)
    e = jnp.exp(logits - m)
    denom = jnp.sum(e, axis=1, keepdims=True)
    o_ref[...] = (e * pl.reciprocal(denom, approx=True)).astype(o_ref.dtype)


def our_module_forward(x, params, *, tb=1024, in_dtype=jnp.bfloat16,
                       out_dtype=jnp.bfloat16):
    """x: [batch, num_inputs]; params = (w1, b1, w2, b2, w3, b3) with W stored [in, out]."""
    w1, b1, w2, b2, w3, b3 = params
    batch, num_inputs = x.shape
    hidden1 = w1.shape[1]
    hidden2 = w2.shape[1]
    num_classes = w3.shape[1]

    # Halve the input read stream: stream x and params as bf16 (kernel upcasts to f32).
    if in_dtype is not None:
        x = x.astype(in_dtype)
        w1, b1, w2, b2, w3, b3 = (a.astype(in_dtype) for a in (w1, b1, w2, b2, w3, b3))

    # Batch tile: multiple of 16 (bf16 sublane packing). Cap tb so there are ~>=8
    # grid blocks when the batch permits, so v7x can stream on both TensorCores.
    tb_cap = _round_up(pl.cdiv(batch, 8), 16)
    tb = max(16, min(_round_up(tb, 16), tb_cap))
    batch_padded = _round_up(batch, tb)
    if batch_padded != batch:
        x = jnp.pad(x, ((0, batch_padded - batch), (0, 0)))

    grid = (batch_padded // tb,)

    # Weights/biases: same (full-array) block every grid step -> fetched once, resident.
    def const_spec(shape):
        return pl.BlockSpec(shape, lambda i: (0, 0))

    out = pl.pallas_call(
        mlp_softmax_kernel,
        out_shape=jax.ShapeDtypeStruct((batch_padded, num_classes), out_dtype),
        grid=grid,
        in_specs=[
            pl.BlockSpec((tb, num_inputs), lambda i: (i, 0)),   # x: tiled over batch
            const_spec((num_inputs, hidden1)),                  # w1
            const_spec((1, hidden1)),                           # b1
            const_spec((hidden1, hidden2)),                     # w2
            const_spec((1, hidden2)),                           # b2
            const_spec((hidden2, num_classes)),                 # w3
            const_spec((1, num_classes)),                       # b3
        ],
        # Unpadded output block: far fewer write bytes than a 128-lane padded slab,
        # and no wrapper class-dim slice (second HBM round trip) afterwards.
        out_specs=pl.BlockSpec((tb, num_classes), lambda i: (i, 0)),
        compiler_params=pltpu.CompilerParams(
            dimension_semantics=("parallel",),
        ),
    )(x, w1, b1, w2, b2, w3, b3)

    if batch_padded != batch:
        out = out[:batch]
    return out


def init_params(key, num_inputs, num_classes):
    """Deterministic init mirroring the layer shapes of OurModule.__init__."""
    k1, k2, k3, k4, k5, k6 = jax.random.split(key, 6)

    def linear(kw, kb, fan_in, fan_out):
        # torch-default-like bound: U(-1/sqrt(fan_in), 1/sqrt(fan_in))
        bound = 1.0 / jnp.sqrt(fan_in)
        w = jax.random.uniform(kw, (fan_in, fan_out), jnp.float32, -bound, bound)
        b = jax.random.uniform(kb, (1, fan_out), jnp.float32, -bound, bound)
        return w, b

    w1, b1 = linear(k1, k2, num_inputs, 5)
    w2, b2 = linear(k3, k4, 5, 20)
    w3, b3 = linear(k5, k6, 20, num_classes)
    return (w1, b1, w2, b2, w3, b3)


def reference_forward(x, params):
    """Pure-JAX reference (eval-mode forward of OurModule), f32 math."""
    w1, b1, w2, b2, w3, b3 = params
    h1 = jnp.maximum(x @ w1 + b1, 0.0)
    h2 = jnp.maximum(h1 @ w2 + b2, 0.0)
    logits = h2 @ w3 + b3
    return jax.nn.softmax(logits, axis=1)


if __name__ == "__main__":
    batch = 200          # not a multiple of the tile -> exercises row padding + slicing
    num_inputs = 32
    num_classes = 10

    key = jax.random.PRNGKey(0)
    kx, kp = jax.random.split(key)
    x = jax.random.normal(kx, (batch, num_inputs), jnp.float32)
    params = init_params(kp, num_inputs, num_classes)

    out = our_module_forward(x, params, tb=64)
    out = jax.block_until_ready(out)

    # Sanity: shape, softmax rows sum to ~1 (bf16 output + approx reciprocal),
    # and match against a pure-JAX reference run on the same bf16-cast operands
    # (the kernel upcasts bf16 -> f32 internally, so the math is identical).
    assert out.shape == (batch, num_classes)
    out_f32 = out.astype(jnp.float32)
    assert jnp.allclose(jnp.sum(out_f32, axis=1), 1.0, atol=2e-2)

    x_ref = x.astype(jnp.bfloat16).astype(jnp.float32)
    params_ref = tuple(p.astype(jnp.bfloat16).astype(jnp.float32) for p in params)
    ref = reference_forward(x_ref, params_ref)
    assert jnp.allclose(out_f32, ref, atol=2e-2, rtol=2e-2)

    print("KERNEL_OK")
</pallas_src>

<mosaic_0001>
module attributes {stable_mosaic.version = 11 : i64} {
  func.func @mlp_softmax_kernel(%arg0: i32, %arg1: memref<32x32xbf16, #tpu.memory_space<vmem>>, %arg2: memref<32x5xbf16, #tpu.memory_space<vmem>>, %arg3: memref<1x5xbf16, #tpu.memory_space<vmem>>, %arg4: memref<5x20xbf16, #tpu.memory_space<vmem>>, %arg5: memref<1x20xbf16, #tpu.memory_space<vmem>>, %arg6: memref<20x10xbf16, #tpu.memory_space<vmem>>, %arg7: memref<1x10xbf16, #tpu.memory_space<vmem>>, %arg8: memref<32x10xbf16, #tpu.memory_space<vmem>>) attributes {dimension_semantics = [#tpu.dimension_semantics<parallel>], iteration_bounds = array<i64: 7>, scalar_prefetch = 0 : i64, scratch_operands = 0 : i64, tpu.core_type = #tpu.core_type<tc>, window_params = [{transform_indices = @transform_0, window_bounds = array<i64: 32, 32>}, {pipeline_mode = #tpu.pipeline_mode<synchronous>, transform_indices = @transform_1, window_bounds = array<i64: 32, 5>}, {pipeline_mode = #tpu.pipeline_mode<synchronous>, transform_indices = @transform_2, window_bounds = array<i64: 1, 5>}, {pipeline_mode = #tpu.pipeline_mode<synchronous>, transform_indices = @transform_3, window_bounds = array<i64: 5, 20>}, {pipeline_mode = #tpu.pipeline_mode<synchronous>, transform_indices = @transform_4, window_bounds = array<i64: 1, 20>}, {pipeline_mode = #tpu.pipeline_mode<synchronous>, transform_indices = @transform_5, window_bounds = array<i64: 20, 10>}, {pipeline_mode = #tpu.pipeline_mode<synchronous>, transform_indices = @transform_6, window_bounds = array<i64: 1, 10>}, {transform_indices = @transform_7, window_bounds = array<i64: 32, 10>}]} {
    %c0 = arith.constant 0 : index
    %c0_0 = arith.constant 0 : index
    %0 = vector.load %arg1[%c0, %c0_0] : memref<32x32xbf16, #tpu.memory_space<vmem>>, vector<32x32xbf16>
    %1 = arith.extf %0 : vector<32x32xbf16> to vector<32x32xf32>
    %c0_1 = arith.constant 0 : index
    %c0_2 = arith.constant 0 : index
    %2 = vector.load %arg2[%c0_1, %c0_2] : memref<32x5xbf16, #tpu.memory_space<vmem>>, vector<32x5xbf16>
    %3 = arith.extf %2 : vector<32x5xbf16> to vector<32x5xf32>
    %cst = arith.constant dense<0.000000e+00> : vector<32x5xf32>
    %4 = tpu.matmul %1, %3, %cst {dimension_numbers = #tpu.dot_dimension_numbers<[1], [0], [0], [1], [0, 0, 1, 1], [], []>} : vector<32x32xf32>, vector<32x5xf32>, vector<32x5xf32> -> vector<32x5xf32>
    %c0_3 = arith.constant 0 : index
    %c0_4 = arith.constant 0 : index
    %5 = vector.load %arg3[%c0_3, %c0_4] : memref<1x5xbf16, #tpu.memory_space<vmem>>, vector<1x5xbf16>
    %6 = arith.extf %5 : vector<1x5xbf16> to vector<1x5xf32>
    %7 = vector.broadcast %6 : vector<1x5xf32> to vector<32x5xf32>
    %8 = arith.addf %4, %7 : vector<32x5xf32>
    %cst_5 = arith.constant 0.000000e+00 : f32
    %9 = vector.broadcast %cst_5 : f32 to vector<32x5xf32>
    %10 = arith.maximumf %8, %9 : vector<32x5xf32>
    %c0_6 = arith.constant 0 : index
    %c0_7 = arith.constant 0 : index
    %11 = vector.load %arg4[%c0_6, %c0_7] : memref<5x20xbf16, #tpu.memory_space<vmem>>, vector<5x20xbf16>
    %12 = arith.extf %11 : vector<5x20xbf16> to vector<5x20xf32>
    %cst_8 = arith.constant dense<0.000000e+00> : vector<32x20xf32>
    %13 = tpu.matmul %10, %12, %cst_8 {dimension_numbers = #tpu.dot_dimension_numbers<[1], [0], [0], [1], [0, 0, 1, 1], [], []>} : vector<32x5xf32>, vector<5x20xf32>, vector<32x20xf32> -> vector<32x20xf32>
    %c0_9 = arith.constant 0 : index
    %c0_10 = arith.constant 0 : index
    %14 = vector.load %arg5[%c0_9, %c0_10] : memref<1x20xbf16, #tpu.memory_space<vmem>>, vector<1x20xbf16>
    %15 = arith.extf %14 : vector<1x20xbf16> to vector<1x20xf32>
    %16 = vector.broadcast %15 : vector<1x20xf32> to vector<32x20xf32>
    %17 = arith.addf %13, %16 : vector<32x20xf32>
    %cst_11 = arith.constant 0.000000e+00 : f32
    %18 = vector.broadcast %cst_11 : f32 to vector<32x20xf32>
    %19 = arith.maximumf %17, %18 : vector<32x20xf32>
    %c0_12 = arith.constant 0 : index
    %c0_13 = arith.constant 0 : index
    %20 = vector.load %arg6[%c0_12, %c0_13] : memref<20x10xbf16, #tpu.memory_space<vmem>>, vector<20x10xbf16>
    %21 = arith.extf %20 : vector<20x10xbf16> to vector<20x10xf32>
    %cst_14 = arith.constant dense<0.000000e+00> : vector<32x10xf32>
    %22 = tpu.matmul %19, %21, %cst_14 {dimension_numbers = #tpu.dot_dimension_numbers<[1], [0], [0], [1], [0, 0, 1, 1], [], []>} : vector<32x20xf32>, vector<20x10xf32>, vector<32x10xf32> -> vector<32x10xf32>
    %c0_15 = arith.constant 0 : index
    %c0_16 = arith.constant 0 : index
    %23 = vector.load %arg7[%c0_15, %c0_16] : memref<1x10xbf16, #tpu.memory_space<vmem>>, vector<1x10xbf16>
    %24 = arith.extf %23 : vector<1x10xbf16> to vector<1x10xf32>
    %25 = vector.broadcast %24 : vector<1x10xf32> to vector<32x10xf32>
    %26 = arith.addf %22, %25 : vector<32x10xf32>
    %cst_17 = arith.constant dense<0xFF800000> : vector<32xf32>
    %27 = vector.multi_reduction <maximumf>, %26, %cst_17 [1] : vector<32x10xf32> to vector<32xf32>
    %28 = vector.shape_cast %27 : vector<32xf32> to vector<32x1xf32>
    %29 = vector.broadcast %28 : vector<32x1xf32> to vector<32x10xf32>
    %30 = arith.subf %26, %29 : vector<32x10xf32>
    %31 = math.exp %30 : vector<32x10xf32>
    %cst_18 = arith.constant dense<0.000000e+00> : vector<32xf32>
    %32 = vector.multi_reduction <add>, %31, %cst_18 [1] : vector<32x10xf32> to vector<32xf32>
    %33 = vector.shape_cast %32 : vector<32xf32> to vector<32x1xf32>
    %34 = tpu.reciprocal %33 {approx = true} : vector<32x1xf32> -> vector<32x1xf32>
    %35 = vector.broadcast %34 : vector<32x1xf32> to vector<32x10xf32>
    %36 = arith.mulf %31, %35 : vector<32x10xf32>
    %37 = arith.truncf %36 : vector<32x10xf32> to vector<32x10xbf16>
    %c0_19 = arith.constant 0 : index
    %c0_20 = arith.constant 0 : index
    %38 = vector.load %arg8[%c0_19, %c0_20] : memref<32x10xbf16, #tpu.memory_space<vmem>>, vector<32x10xbf16>
    tpu.vector_store %arg8[%c0_19, %c0_20], %37 {strides = array<i32>} : memref<32x10xbf16, #tpu.memory_space<vmem>>, vector<32x10xbf16>,
    return
  }
  func.func @transform_0(%arg0: i32) -> (i32, i32) {
    %c0_i32 = arith.constant 0 : i32
    %c0_i32_0 = arith.constant 0 : i32
    return %arg0, %c0_i32 : i32, i32
  }
  func.func @transform_1(%arg0: i32) -> (i32, i32) {
    %c0_i32 = arith.constant 0 : i32
    %c0_i32_0 = arith.constant 0 : i32
    %c0_i32_1 = arith.constant 0 : i32
    return %c0_i32, %c0_i32_0 : i32, i32
  }
  func.func @transform_2(%arg0: i32) -> (i32, i32) {
    %c0_i32 = arith.constant 0 : i32
    %c0_i32_0 = arith.constant 0 : i32
    %c0_i32_1 = arith.constant 0 : i32
    return %c0_i32, %c0_i32_0 : i32, i32
  }
  func.func @transform_3(%arg0: i32) -> (i32, i32) {
    %c0_i32 = arith.constant 0 : i32
    %c0_i32_0 = arith.constant 0 : i32
    %c0_i32_1 = arith.constant 0 : i32
    return %c0_i32, %c0_i32_0 : i32, i32
  }
  func.func @transform_4(%arg0: i32) -> (i32, i32) {
    %c0_i32 = arith.constant 0 : i32
    %c0_i32_0 = arith.constant 0 : i32
    %c0_i32_1 = arith.constant 0 : i32
    return %c0_i32, %c0_i32_0 : i32, i32
  }
  func.func @transform_5(%arg0: i32) -> (i32, i32) {
    %c0_i32 = arith.constant 0 : i32
    %c0_i32_0 = arith.constant 0 : i32
    %c0_i32_1 = arith.constant 0 : i32
    return %c0_i32, %c0_i32_0 : i32, i32
  }
  func.func @transform_6(%arg0: i32) -> (i32, i32) {
    %c0_i32 = arith.constant 0 : i32
    %c0_i32_0 = arith.constant 0 : i32
    %c0_i32_1 = arith.constant 0 : i32
    return %c0_i32, %c0_i32_0 : i32, i32
  }
  func.func @transform_7(%arg0: i32) -> (i32, i32) {
    %c0_i32 = arith.constant 0 : i32
    %c0_i32_0 = arith.constant 0 : i32
    return %arg0, %c0_i32 : i32, i32
  }
}

</mosaic_0001>

<llo_original>
// kernel: tpu_custom_call.1
$region0: #{tpu_custom_call.1}
  #allocation0 [shape = 'u32[]', space=smem, size = 0x4, offset = 0x4, fixed_abs, tag = 'smem constant byte address 0x4 - core index']
  #allocation1 [shape = 'u32[144,128]{1,0:T(1,128)}', space=vmem, size = 0x12000, scoped, tag = 'internal scratch']
  %s0 = inlined_call_operand.vmem [shape: bf16[224,32], index: 0, kind: input, shape index: {}]
  %s1 = inlined_call_operand.vmem [shape: bf16[32,5], index: 1, kind: input, shape index: {}]
  %s2 = inlined_call_operand.vmem [shape: bf16[1,5], index: 2, kind: input, shape index: {}]
  %s3 = inlined_call_operand.vmem [shape: bf16[5,20], index: 3, kind: input, shape index: {}]
  %s4 = inlined_call_operand.vmem [shape: bf16[1,20], index: 4, kind: input, shape index: {}]
  %s5 = inlined_call_operand.vmem [shape: bf16[20,10], index: 5, kind: input, shape index: {}]
  %s6 = inlined_call_operand.vmem [shape: bf16[1,10], index: 6, kind: input, shape index: {}]
  %s7 = inlined_call_operand.vmem [shape: bf16[224,10], index: 7, kind: output, shape index: {}]
  %s8 = sld [smem:[#allocation0]]
  $region61: #{tpu_custom_call.1} parent=0
    _
  %s10 = ssub.s32 1, %s8
  %s11 = scalar_select 0, %s10, %s8
  loop: start=0, step=1, limit=9
  $region2: #{tpu_custom_call.1} parent=0 // loop_pre_header
    _
  $region3: #{tpu_custom_call.1} parent=0 // loop_header
    %s13 = sphi 0, %s17
    %p14 = scmp.ge.s32.totalorder %s13, 9
    %s23 = sphi 0, %s25
    %s26 = sphi 0, %s23
    %s27 = sphi 0, %s26
    %s43 = sphi 0, %s27
    %s47 = sphi 0, %s47
    %s49 = sphi 0, %s47
    %s50 = sphi 0, %s49
    %s64 = sphi 0, %s50
    %s68 = sphi 0, %s68
    %s70 = sphi 0, %s68
    %s71 = sphi 0, %s70
    %s85 = sphi 0, %s71
    %s89 = sphi 0, %s89
    %s91 = sphi 0, %s89
    %s92 = sphi 0, %s91
    %s106 = sphi 0, %s92
    %s110 = sphi 0, %s110
    %s112 = sphi 0, %s110
    %s113 = sphi 0, %s112
    %s127 = sphi 0, %s113
    %s131 = sphi 0, %s131
    %s133 = sphi 0, %s131
    %s134 = sphi 0, %s133
    %s148 = sphi 0, %s134
    %s152 = sphi 0, %s152
    %s154 = sphi 0, %s152
    %s155 = sphi 0, %s154
    %s169 = sphi 0, %s155
    %s175 = sphi 0, %s177
    %s178 = sphi 0, %s175
    %s179 = sphi 0, %s178
    %s195 = sphi 0, %s179
  $region4: #{tpu_custom_call.1} parent=0 // loop_header_branch
    %16 = sbr.rel (%p14) target = $region8
  $region5: #{tpu_custom_call.1} parent=0 // loop_body
    %s18 = ssub.s32 %s13, 1
    %s19 = ssub.s32 %s13, 2
    %s20 = sadd.s32 %s13, 1
    %s21 = ssub.s32 %s13, %s20
    %p22 = scmp.eq.s32.totalorder %s21, 0
    %s24 = sadd.s32 %s23, 1
    %s25 = scalar_select %p22, %s23, %s24
    %p28 = pneg %p22
    %p29 = scmp.eq.s32.totalorder %s13, 6
    %p30 = por %p28, %p29
    %p31 = scmp.ne.s32.totalorder %s23, %s26
    %p32 = scmp.eq.s32.totalorder %s13, 0
    %p33 = por %p31, %p32
    %p34 = scmp.ne.s32.totalorder %s23, %s26
    %p35 = scmp.eq.s32.totalorder %s18, 6
    %p36 = por %p34, %p35
    %p37 = scmp.ne.s32.totalorder %s26, %s27
    %p38 = scmp.eq.s32.totalorder %s18, 0
    %p39 = por %p37, %p38
    %p40 = scmp.ne.s32.totalorder %s26, %s27
    %p41 = scmp.eq.s32.totalorder %s19, 6
    %p42 = por %p40, %p41
    %p44 = scmp.ne.s32.totalorder %s27, %s43
    %p45 = scmp.eq.s32.totalorder %s19, 0
    %p46 = por %p44, %p45
    %s48 = sadd.s32 %s47, 1
    %p51 = scmp.eq.s32.totalorder %s13, 6
    %p52 = scmp.ne.s32.totalorder %s47, %s49
    %p53 = scmp.eq.s32.totalorder %s13, 0
    %p54 = por %p52, %p53
    %p55 = scmp.ne.s32.totalorder %s47, %s49
    %p56 = scmp.eq.s32.totalorder %s18, 6
    %p57 = por %p55, %p56
    %p58 = scmp.ne.s32.totalorder %s49, %s50
    %p59 = scmp.eq.s32.totalorder %s18, 0
    %p60 = por %p58, %p59
    %p61 = scmp.ne.s32.totalorder %s49, %s50
    %p62 = scmp.eq.s32.totalorder %s19, 6
    %p63 = por %p61, %p62
    %p65 = scmp.ne.s32.totalorder %s50, %s64
    %p66 = scmp.eq.s32.totalorder %s19, 0
    %p67 = por %p65, %p66
    %s69 = sadd.s32 %s68, 1
    %p72 = scmp.eq.s32.totalorder %s13, 6
    %p73 = scmp.ne.s32.totalorder %s68, %s70
    %p74 = scmp.eq.s32.totalorder %s13, 0
    %p75 = por %p73, %p74
    %p76 = scmp.ne.s32.totalorder %s68, %s70
    %p77 = scmp.eq.s32.totalorder %s18, 6
    %p78 = por %p76, %p77
    %p79 = scmp.ne.s32.totalorder %s70, %s71
    %p80 = scmp.eq.s32.totalorder %s18, 0
    %p81 = por %p79, %p80
    %p82 = scmp.ne.s32.totalorder %s70, %s71
    %p83 = scmp.eq.s32.totalorder %s19, 6
    %p84 = por %p82, %p83
    %p86 = scmp.ne.s32.totalorder %s71, %s85
    %p87 = scmp.eq.s32.totalorder %s19, 0
    %p88 = por %p86, %p87
    %s90 = sadd.s32 %s89, 1
    %p93 = scmp.eq.s32.totalorder %s13, 6
    %p94 = scmp.ne.s32.totalorder %s89, %s91
    %p95 = scmp.eq.s32.totalorder %s13, 0
    %p96 = por %p94, %p95
    %p97 = scmp.ne.s32.totalorder %s89, %s91
    %p98 = scmp.eq.s32.totalorder %s18, 6
    %p99 = por %p97, %p98
    %p100 = scmp.ne.s32.totalorder %s91, %s92
    %p101 = scmp.eq.s32.totalorder %s18, 0
    %p102 = por %p100, %p101
    %p103 = scmp.ne.s32.totalorder %s91, %s92
    %p104 = scmp.eq.s32.totalorder %s19, 6
    %p105 = por %p103, %p104
    %p107 = scmp.ne.s32.totalorder %s92, %s106
    %p108 = scmp.eq.s32.totalorder %s19, 0
    %p109 = por %p107, %p108
    %s111 = sadd.s32 %s110, 1
    %p114 = scmp.eq.s32.totalorder %s13, 6
    %p115 = scmp.ne.s32.totalorder %s110, %s112
    %p116 = scmp.eq.s32.totalorder %s13, 0
    %p117 = por %p115, %p116
    %p118 = scmp.ne.s32.totalorder %s110, %s112
    %p119 = scmp.eq.s32.totalorder %s18, 6
    %p120 = por %p118, %p119
    %p121 = scmp.ne.s32.totalorder %s112, %s113
    %p122 = scmp.eq.s32.totalorder %s18, 0
    %p123 = por %p121, %p122
    %p124 = scmp.ne.s32.totalorder %s112, %s113
    %p125 = scmp.eq.s32.totalorder %s19, 6
    %p126 = por %p124, %p125
    %p128 = scmp.ne.s32.totalorder %s113, %s127
    %p129 = scmp.eq.s32.totalorder %s19, 0
    %p130 = por %p128, %p129
    %s132 = sadd.s32 %s131, 1
    %p135 = scmp.eq.s32.totalorder %s13, 6
    %p136 = scmp.ne.s32.totalorder %s131, %s133
    %p137 = scmp.eq.s32.totalorder %s13, 0
    %p138 = por %p136, %p137
    %p139 = scmp.ne.s32.totalorder %s131, %s133
    %p140 = scmp.eq.s32.totalorder %s18, 6
    %p141 = por %p139, %p140
    %p142 = scmp.ne.s32.totalorder %s133, %s134
    %p143 = scmp.eq.s32.totalorder %s18, 0
    %p144 = por %p142, %p143
    %p145 = scmp.ne.s32.totalorder %s133, %s134
    %p146 = scmp.eq.s32.totalorder %s19, 6
    %p147 = por %p145, %p146
    %p149 = scmp.ne.s32.totalorder %s134, %s148
    %p150 = scmp.eq.s32.totalorder %s19, 0
    %p151 = por %p149, %p150
    %s153 = sadd.s32 %s152, 1
    %p156 = scmp.eq.s32.totalorder %s13, 6
    %p157 = scmp.ne.s32.totalorder %s152, %s154
    %p158 = scmp.eq.s32.totalorder %s13, 0
    %p159 = por %p157, %p158
    %p160 = scmp.ne.s32.totalorder %s152, %s154
    %p161 = scmp.eq.s32.totalorder %s18, 6
    %p162 = por %p160, %p161
    %p163 = scmp.ne.s32.totalorder %s154, %s155
    %p164 = scmp.eq.s32.totalorder %s18, 0
    %p165 = por %p163, %p164
    %p166 = scmp.ne.s32.totalorder %s154, %s155
    %p167 = scmp.eq.s32.totalorder %s19, 6
    %p168 = por %p166, %p167
    %p170 = scmp.ne.s32.totalorder %s155, %s169
    %p171 = scmp.eq.s32.totalorder %s19, 0
    %p172 = por %p170, %p171
    %s173 = ssub.s32 %s13, %s20
    %p174 = scmp.eq.s32.totalorder %s173, 0
    %s176 = sadd.s32 %s175, 1
    %s177 = scalar_select %p174, %s175, %s176
    %p180 = pneg %p174
    %p181 = scmp.eq.s32.totalorder %s13, 6
    %p182 = por %p180, %p181
    %p183 = scmp.ne.s32.totalorder %s175, %s178
    %p184 = scmp.eq.s32.totalorder %s13, 0
    %p185 = por %p183, %p184
    %p186 = scmp.ne.s32.totalorder %s175, %s178
    %p187 = scmp.eq.s32.totalorder %s18, 6
    %p188 = por %p186, %p187
    %p189 = scmp.ne.s32.totalorder %s178, %s179
    %p190 = scmp.eq.s32.totalorder %s18, 0
    %p191 = por %p189, %p190
    %p192 = scmp.ne.s32.totalorder %s178, %s179
    %p193 = scmp.eq.s32.totalorder %s19, 6
    %p194 = por %p192, %p193
    %p196 = scmp.ne.s32.totalorder %s179, %s195
    %p197 = scmp.eq.s32.totalorder %s19, 0
    %p198 = por %p196, %p197
    %p199 = scmp.le.s32.totalorder 1, %s13
    %p200 = scmp.lt.s32.totalorder %s13, 8
    %p201 = pnand %p199, %p200
    %p202 = pneg %p201
    // Predicated region
    $region9: #{tpu_custom_call.1} parent=5 // pred_check
      _
    $region10: #{tpu_custom_call.1} parent=5 // pred_check_branch
      %204 = sbr.rel (%p201) target = $region12
    $region11: #{tpu_custom_call.1} parent=5 // pred_region
      %s205 = ssub.s32 %s13, 1
      // Predicated region
      $region13: #{tpu_custom_call.1} parent=11 // pred_check
        %p206 = pneg %p60
      $region14: #{tpu_custom_call.1} parent=11 // pred_check_branch
        %208 = sbr.rel (%p206) target = $region16
      $region15: #{tpu_custom_call.1} parent=11 // pred_region
        _
      $region16: #{tpu_custom_call.1} parent=11 // pred_fallthru
        _
      // Predicated region
      $region17: #{tpu_custom_call.1} parent=11 // pred_check
        %p209 = pneg %p81
      $region18: #{tpu_custom_call.1} parent=11 // pred_check_branch
        %211 = sbr.rel (%p209) target = $region20
      $region19: #{tpu_custom_call.1} parent=11 // pred_region
        _
      $region20: #{tpu_custom_call.1} parent=11 // pred_fallthru
        _
      // Predicated region
      $region21: #{tpu_custom_call.1} parent=11 // pred_check
        %p212 = pneg %p102
      $region22: #{tpu_custom_call.1} parent=11 // pred_check_branch
        %214 = sbr.rel (%p212) target = $region24
      $region23: #{tpu_custom_call.1} parent=11 // pred_region
        _
      $region24: #{tpu_custom_call.1} parent=11 // pred_fallthru
        _
      // Predicated region
      $region25: #{tpu_custom_call.1} parent=11 // pred_check
        %p215 = pneg %p123
      $region26: #{tpu_custom_call.1} parent=11 // pred_check_branch
        %217 = sbr.rel (%p215) target = $region28
      $region27: #{tpu_custom_call.1} parent=11 // pred_region
        _
      $region28: #{tpu_custom_call.1} parent=11 // pred_fallthru
        _
      // Predicated region
      $region29: #{tpu_custom_call.1} parent=11 // pred_check
        %p218 = pneg %p144
      $region30: #{tpu_custom_call.1} parent=11 // pred_check_branch
        %220 = sbr.rel (%p218) target = $region32
      $region31: #{tpu_custom_call.1} parent=11 // pred_region
        _
      $region32: #{tpu_custom_call.1} parent=11 // pred_fallthru
        _
      // Predicated region
      $region33: #{tpu_custom_call.1} parent=11 // pred_check
        %p221 = pneg %p165
      $region34: #{tpu_custom_call.1} parent=11 // pred_check_branch
        %223 = sbr.rel (%p221) target = $region36
      $region35: #{tpu_custom_call.1} parent=11 // pred_region
        _
      $region36: #{tpu_custom_call.1} parent=11 // pred_fallthru
        _
    $region12: #{tpu_custom_call.1} parent=5 // pred_fallthru
      _
    %p224 = scmp.lt.s32.totalorder %s13, 7
    // Predicated region
    $region37: #{tpu_custom_call.1} parent=5 // pred_check
      %p225 = pneg %p224
    $region38: #{tpu_custom_call.1} parent=5 // pred_check_branch
      %227 = sbr.rel (%p225) target = $region40
    $region39: #{tpu_custom_call.1} parent=5 // pred_region
      // Predicated region
      $region41: #{tpu_custom_call.1} parent=39 // pred_check
        %p228 = pneg %p33
      $region42: #{tpu_custom_call.1} parent=39 // pred_check_branch
        %230 = sbr.rel (%p228) target = $region44
      $region43: #{tpu_custom_call.1} parent=39 // pred_region
        %s231 = smul.u32 4, %s13
        %p232 = scmp.lt.s32.totalorder %s231, 27
        %s233 = scalar_select %p232, %s231, 27
        %s234 = smul.addr %s233, 4
        %s235 = scalar_lea.vmem %s0, %s234
        %s236 = smul.u32 4, %s13
      $region44: #{tpu_custom_call.1} parent=39 // pred_fallthru
        _
    $region40: #{tpu_custom_call.1} parent=5 // pred_fallthru
      _
    %p237 = scmp.le.s32.totalorder 1, %s13
    %p238 = scmp.lt.s32.totalorder %s13, 8
    %p239 = pnand %p237, %p238
    %p240 = pneg %p239
    // Predicated region
    $region45: #{tpu_custom_call.1} parent=5 // pred_check
      _
    $region46: #{tpu_custom_call.1} parent=5 // pred_check_branch
      %242 = sbr.rel (%p239) target = $region48
    $region47: #{tpu_custom_call.1} parent=5 // pred_region
      %s243 = ssub.s32 %s13, 1
      %s244 = smul.u32 4, %s18
      %p245 = scmp.lt.s32.totalorder %s244, 27
      %s246 = scalar_select %p245, %s244, 27
      %s247 = smul.addr %s246, 4
      %s248 = scalar_lea.vmem %s0, %s247
      %p249 = pneg %p39
      %p250 = pneg %p36
      %p251 = pneg %p60
      %p252 = pneg %p57
      %p253 = pneg %p81
      %p254 = pneg %p78
      %p255 = pneg %p102
      %p256 = pneg %p99
      %p257 = pneg %p123
      %p258 = pneg %p120
      %p259 = pneg %p144
      %p260 = pneg %p141
      %p261 = pneg %p165
      %p262 = pneg %p162
      %p263 = pneg %p191
      %p264 = pneg %p188
      %s265 = smul.u32 4, %s18
      %p266 = scmp.lt.s32.totalorder %s265, 27
      %s267 = scalar_select %p266, %s265, 27
      %s268 = smul.addr %s267, 4
      %s269 = scalar_lea.vmem %s7, %s268
      %s270 = smul.u32 4, %s18
      %p271 = scmp.lt.s32.totalorder %s270, 27
      %s272 = scalar_select %p271, %s270, 27
      %s273 = smul.addr %s272, 4
      %s274 = scalar_lea.vmem %s0, %s273
      %s275 = smul.u32 4, %s18
      %s276 = smul.u32 4, %s18
      %p277 = scmp.lt.s32.totalorder %s276, 27
      %s278 = scalar_select %p277, %s276, 27
      %s279 = smul.addr %s278, 4
      %s280 = scalar_lea.vmem %s7, %s279
      %s281 = smul.u32 4, %s18
      %v282 = vld [vmem:[%s274] sm:$0xf]
      %v283 = vld [vmem:[%s274 + $0x4] sm:$0xf]
      %v284 = vld [vmem:[%s274 + $0x8] sm:$0xf]
      %v285 = vld [vmem:[%s274 + $0xc] sm:$0xf]
      %v286 = vunpack.c.l.bf16 %v282
      %v287 = vunpack.c.l.bf16 %v283
      %v288 = vunpack.c.l.bf16 %v284
      %v289 = vunpack.c.l.bf16 %v285
      %v290 = vld [vmem:[%s1] sm:$0xf]
      %v291 = vld [vmem:[%s1 + $0x4] sm:$0xf]
      %v292 = vld [vmem:[%s1 + $0x8] sm:$0xf]
      %v293 = vld [vmem:[%s1 + $0xc] sm:$0xf]
      %v294 = vunpack.c.l.bf16 %v290
      %v295 = vunpack.c.l.bf16 %v291
      %v296 = vunpack.c.l.bf16 %v292
      %v297 = vunpack.c.l.bf16 %v293
      %v298 = vld [vmem:[%s2] sm:$0x1]
      %v299 = vunpack.c.l.bf16 %v298
      %v300 = vlaneseq
      %v301 = vshrl.u32 %v300, 7
      %v302 = vsub.s32 0, %v301
      %v303 = vrot.slane %v299, %v302
      %vm304 = vcmask 261120
      %v306 = vsel %vm304, %v286, 0
      %v309 = vsel %vm304, %v287, 0
      %v312 = vsel %vm304, %v288, 0
      %v315 = vsel %vm304, %v289, 0
      %317 = vmatprep.subr.mxu0 0.0
      %318 = vmatpush1.msra.mxu0 %v294
      %319 = vmatprep.subr.mxu0 0.0
      %320 = vmatpush1.msra.mxu0 %v295
      %321 = vmatprep.subr.mxu0 0.0
      %322 = vmatpush1.msra.mxu0 %v296
      %323 = vmatprep.subr.mxu0 0.0
      %324 = vmatpush1.msra.mxu0 %v297
      %325 = vmatprep.subr.mxu0 0.0
      %326 = vmatpush1.msra.mxu0 0.0
      %327 = vmatprep.subr.mxu0 0.0
      %328 = vmatpush1.msra.mxu0 0.0
      %329 = vmatprep.subr.mxu0 0.0
      %330 = vmatpush1.msra.mxu0 0.0
      %331 = vmatprep.subr.mxu0 0.0
      %332 = vmatpush1.msra.mxu0 0.0
      %333 = vmatprep.subr.mxu0 0.0
      %334 = vmatpush1.msra.mxu0 0.0
      %335 = vmatprep.subr.mxu0 0.0
      %336 = vmatpush1.msra.mxu0 0.0
      %337 = vmatprep.subr.mxu0 0.0
      %338 = vmatpush1.msra.mxu0 0.0
      %339 = vmatprep.subr.mxu0 0.0
      %340 = vmatpush1.msra.mxu0 0.0
      %341 = vmatprep.subr.mxu0 0.0
      %342 = vmatpush1.msra.mxu0 0.0
      %343 = vmatprep.subr.mxu0 0.0
      %344 = vmatpush1.msra.mxu0 0.0
      %345 = vmatprep.subr.mxu0 0.0
      %346 = vmatpush1.msra.mxu0 0.0
      %347 = vmatprep.subr.mxu0 0.0
      %348 = vmatpush1.msra.mxu0 0.0
      %349 = vmatprep.subr.mxu0 0.0
      %350 = vmatpush1.msra.mxu0 0.0
      %351 = vmatprep.subr.mxu0 0.0
      %352 = vmatpush1.msra.mxu0 0.0
      %353 = vmatprep.subr.mxu0 0.0
      %354 = vmatpush1.msra.mxu0 0.0
      %355 = vmatprep.subr.mxu0 0.0
      %356 = vmatpush1.msra.mxu0 0.0
      %357 = vmatprep.subr.mxu0 0.0
      %358 = vmatpush1.msra.mxu0 0.0
      %359 = vmatprep.subr.mxu0 0.0
      %360 = vmatpush1.msra.mxu0 0.0
      %361 = vmatprep.subr.mxu0 0.0
      %362 = vmatpush1.msra.mxu0 0.0
      %363 = vmatprep.subr.mxu0 0.0
      %364 = vmatpush1.msra.mxu0 0.0
      %365 = vmatprep.subr.mxu0 0.0
      %366 = vmatpush1.msra.mxu0 0.0
      %367 = vmatprep.subr.mxu0 0.0
      %368 = vmatpush1.msra.mxu0 0.0
      %369 = vmatprep.subr.mxu0 0.0
      %370 = vmatpush1.msra.mxu0 0.0
      %371 = vmatprep.subr.mxu0 0.0
      %372 = vmatpush1.msra.mxu0 0.0
      %373 = vmatprep.subr.mxu0 0.0
      %374 = vmatpush1.msra.mxu0 0.0
      %375 = vmatprep.subr.mxu0 0.0
      %376 = vmatpush1.msra.mxu0 0.0
      %377 = vmatprep.subr.mxu0 0.0
      %378 = vmatpush1.msra.mxu0 0.0
      %379 = vmatprep.subr.mxu0 0.0
      %380 = vmatpush1.msra.mxu0 0.0
      %381 = vmatprep.mubr.f32.mxu0 0.0
      %382 = vmatmul.mubr.f32.gmra.mrb[0].mxu0 %v306
      %v383 = vpop.f32.mrb[0].mxu0
      %v384 = vadd.f32 %v303, %v383
      %v385 = vpop.f32.mrb[0].mxu0
      %386 = vmatprep.mubr.f32.mxu0 0.0
      %387 = vmatmul.mubr.f32.gmra.mrb[0].mxu0 %v309
      %v388 = vpop.f32.mrb[0].mxu0
      %v389 = vadd.f32 %v303, %v388
      %v390 = vpop.f32.mrb[0].mxu0
      %391 = vmatprep.mubr.f32.mxu0 0.0
      %392 = vmatmul.mubr.f32.gmra.mrb[0].mxu0 %v312
      %v393 = vpop.f32.mrb[0].mxu0
      %v394 = vadd.f32 %v303, %v393
      %v395 = vpop.f32.mrb[0].mxu0
      %396 = vmatprep.mubr.f32.mxu0 0.0
      %397 = vmatmul.mubr.f32.gmra.mrb[0].mxu0 %v315
      %v398 = vpop.f32.mrb[0].mxu0
      %v399 = vadd.f32 %v303, %v398
      %v400 = vpop.f32.mrb[0].mxu0
      %401 = vdwg.mxu0
      %v402 = vmax.f32 %v384, 0.0
      %v403 = vmax.f32 %v389, 0.0
      %v404 = vmax.f32 %v394, 0.0
      %v405 = vmax.f32 %v399, 0.0
      %v406 = vld [vmem:[%s3] sm:$0x7]
      %v407 = vunpack.c.l.bf16 %v406
      %v408 = vld [vmem:[%s4] sm:$0x1]
      %v409 = vunpack.c.l.bf16 %v408
      %v410 = vlaneseq
      %v411 = vshrl.u32 %v410, 7
      %v412 = vsub.s32 0, %v411
      %v413 = vrot.slane %v409, %v412
      %vm414 = vcmask 39936
      %v416 = vsel %vm414, %v402, 0
      %v419 = vsel %vm414, %v403, 0
      %v422 = vsel %vm414, %v404, 0
      %v425 = vsel %vm414, %v405, 0
      %vm427 = vcmask 1044480
      %v429 = vsel %vm427, %v407, 0
      %431 = vmatprep.subr.mxu0 0.0
      %432 = vmatpush1.msra.mxu0 %v429
      %433 = vmatprep.subr.mxu0 0.0
      %434 = vmatpush1.msra.mxu0 0.0
      %435 = vmatprep.subr.mxu0 0.0
      %436 = vmatpush1.msra.mxu0 0.0
      %437 = vmatprep.subr.mxu0 0.0
      %438 = vmatpush1.msra.mxu0 0.0
      %439 = vmatprep.subr.mxu0 0.0
      %440 = vmatpush1.msra.mxu0 0.0
      %441 = vmatprep.subr.mxu0 0.0
      %442 = vmatpush1.msra.mxu0 0.0
      %443 = vmatprep.subr.mxu0 0.0
      %444 = vmatpush1.msra.mxu0 0.0
      %445 = vmatprep.subr.mxu0 0.0
      %446 = vmatpush1.msra.mxu0 0.0
      %447 = vmatprep.subr.mxu0 0.0
      %448 = vmatpush1.msra.mxu0 0.0
      %449 = vmatprep.subr.mxu0 0.0
      %450 = vmatpush1.msra.mxu0 0.0
      %451 = vmatprep.subr.mxu0 0.0
      %452 = vmatpush1.msra.mxu0 0.0
      %453 = vmatprep.subr.mxu0 0.0
      %454 = vmatpush1.msra.mxu0 0.0
      %455 = vmatprep.subr.mxu0 0.0
      %456 = vmatpush1.msra.mxu0 0.0
      %457 = vmatprep.subr.mxu0 0.0
      %458 = vmatpush1.msra.mxu0 0.0
      %459 = vmatprep.subr.mxu0 0.0
      %460 = vmatpush1.msra.mxu0 0.0
      %461 = vmatprep.subr.mxu0 0.0
      %462 = vmatpush1.msra.mxu0 0.0
      %463 = vmatprep.subr.mxu0 0.0
      %464 = vmatpush1.msra.mxu0 0.0
      %465 = vmatprep.subr.mxu0 0.0
      %466 = vmatpush1.msra.mxu0 0.0
      %467 = vmatprep.subr.mxu0 0.0
      %468 = vmatpush1.msra.mxu0 0.0
      %469 = vmatprep.subr.mxu0 0.0
      %470 = vmatpush1.msra.mxu0 0.0
      %471 = vmatprep.subr.mxu0 0.0
      %472 = vmatpush1.msra.mxu0 0.0
      %473 = vmatprep.subr.mxu0 0.0
      %474 = vmatpush1.msra.mxu0 0.0
      %475 = vmatprep.subr.mxu0 0.0
      %476 = vmatpush1.msra.mxu0 0.0
      %477 = vmatprep.subr.mxu0 0.0
      %478 = vmatpush1.msra.mxu0 0.0
      %479 = vmatprep.subr.mxu0 0.0
      %480 = vmatpush1.msra.mxu0 0.0
      %481 = vmatprep.subr.mxu0 0.0
      %482 = vmatpush1.msra.mxu0 0.0
      %483 = vmatprep.subr.mxu0 0.0
      %484 = vmatpush1.msra.mxu0 0.0
      %485 = vmatprep.subr.mxu0 0.0
      %486 = vmatpush1.msra.mxu0 0.0
      %487 = vmatprep.subr.mxu0 0.0
      %488 = vmatpush1.msra.mxu0 0.0
      %489 = vmatprep.subr.mxu0 0.0
      %490 = vmatpush1.msra.mxu0 0.0
      %491 = vmatprep.subr.mxu0 0.0
      %492 = vmatpush1.msra.mxu0 0.0
      %493 = vmatprep.subr.mxu0 0.0
      %494 = vmatpush1.msra.mxu0 0.0
      %495 = vmatprep.mubr.f32.mxu0 0.0
      %496 = vmatmul.mubr.f32.gmra.mrb[0].mxu0 %v416
      %v497 = vpop.f32.mrb[0].mxu0
      %v498 = vadd.f32 %v413, %v497
      %v499 = vpop.f32.mrb[0].mxu0
      %500 = vmatprep.mubr.f32.mxu0 0.0
      %501 = vmatmul.mubr.f32.gmra.mrb[0].mxu0 %v419
      %v502 = vpop.f32.mrb[0].mxu0
      %v503 = vadd.f32 %v413, %v502
      %v504 = vpop.f32.mrb[0].mxu0
      %505 = vmatprep.mubr.f32.mxu0 0.0
      %506 = vmatmul.mubr.f32.gmra.mrb[0].mxu0 %v422
      %v507 = vpop.f32.mrb[0].mxu0
      %v508 = vadd.f32 %v413, %v507
      %v509 = vpop.f32.mrb[0].mxu0
      %510 = vmatprep.mubr.f32.mxu0 0.0
      %511 = vmatmul.mubr.f32.gmra.mrb[0].mxu0 %v425
      %v512 = vpop.f32.mrb[0].mxu0
      %v513 = vadd.f32 %v413, %v512
      %v514 = vpop.f32.mrb[0].mxu0
      %515 = vdwg.mxu0
      %v516 = vmax.f32 %v498, 0.0
      %v517 = vmax.f32 %v503, 0.0
      %v518 = vmax.f32 %v508, 0.0
      %v519 = vmax.f32 %v513, 0.0
      %v520 = vld [vmem:[%s5] sm:$0xf]
      %v521 = vld [vmem:[%s5 + $0x4] sm:$0xf]
      %v522 = vld [vmem:[%s5 + $0x8] sm:$0x3]
      %v523 = vunpack.c.l.bf16 %v520
      %v524 = vunpack.c.l.bf16 %v521
      %v525 = vunpack.c.l.bf16 %v522
      %v526 = vld [vmem:[%s6] sm:$0x1]
      %v527 = vunpack.c.l.bf16 %v526
      %v528 = vlaneseq
      %v529 = vshrl.u32 %v528, 7
      %v530 = vsub.s32 0, %v529
      %v531 = vrot.slane %v527, %v530
      %vm532 = vcmask 162816
      %v534 = vsel %vm532, %v516, 0
      %v537 = vsel %vm532, %v517, 0
      %v540 = vsel %vm532, %v518, 0
      %v543 = vsel %vm532, %v519, 0
      %vm545 = vcmask 1043456
      %v547 = vsel %vm545, %v525, 0
      %549 = vmatprep.subr.mxu0 0.0
      %550 = vmatpush1.msra.mxu0 %v523
      %551 = vmatprep.subr.mxu0 0.0
      %552 = vmatpush1.msra.mxu0 %v524
      %553 = vmatprep.subr.mxu0 0.0
      %554 = vmatpush1.msra.mxu0 %v547
      %555 = vmatprep.subr.mxu0 0.0
      %556 = vmatpush1.msra.mxu0 0.0
      %557 = vmatprep.subr.mxu0 0.0
      %558 = vmatpush1.msra.mxu0 0.0
      %559 = vmatprep.subr.mxu0 0.0
      %560 = vmatpush1.msra.mxu0 0.0
      %561 = vmatprep.subr.mxu0 0.0
      %562 = vmatpush1.msra.mxu0 0.0
      %563 = vmatprep.subr.mxu0 0.0
      %564 = vmatpush1.msra.mxu0 0.0
      %565 = vmatprep.subr.mxu0 0.0
      %566 = vmatpush1.msra.mxu0 0.0
      %567 = vmatprep.subr.mxu0 0.0
      %568 = vmatpush1.msra.mxu0 0.0
      %569 = vmatprep.subr.mxu0 0.0
      %570 = vmatpush1.msra.mxu0 0.0
      %571 = vmatprep.subr.mxu0 0.0
      %572 = vmatpush1.msra.mxu0 0.0
      %573 = vmatprep.subr.mxu0 0.0
      %574 = vmatpush1.msra.mxu0 0.0
      %575 = vmatprep.subr.mxu0 0.0
      %576 = vmatpush1.msra.mxu0 0.0
      %577 = vmatprep.subr.mxu0 0.0
      %578 = vmatpush1.msra.mxu0 0.0
      %579 = vmatprep.subr.mxu0 0.0
      %580 = vmatpush1.msra.mxu0 0.0
      %581 = vmatprep.subr.mxu0 0.0
      %582 = vmatpush1.msra.mxu0 0.0
      %583 = vmatprep.subr.mxu0 0.0
      %584 = vmatpush1.msra.mxu0 0.0
      %585 = vmatprep.subr.mxu0 0.0
      %586 = vmatpush1.msra.mxu0 0.0
      %587 = vmatprep.subr.mxu0 0.0
      %588 = vmatpush1.msra.mxu0 0.0
      %589 = vmatprep.subr.mxu0 0.0
      %590 = vmatpush1.msra.mxu0 0.0
      %591 = vmatprep.subr.mxu0 0.0
      %592 = vmatpush1.msra.mxu0 0.0
      %593 = vmatprep.subr.mxu0 0.0
      %594 = vmatpush1.msra.mxu0 0.0
      %595 = vmatprep.subr.mxu0 0.0
      %596 = vmatpush1.msra.mxu0 0.0
      %597 = vmatprep.subr.mxu0 0.0
      %598 = vmatpush1.msra.mxu0 0.0
      %599 = vmatprep.subr.mxu0 0.0
      %600 = vmatpush1.msra.mxu0 0.0
      %601 = vmatprep.subr.mxu0 0.0
      %602 = vmatpush1.msra.mxu0 0.0
      %603 = vmatprep.subr.mxu0 0.0
      %604 = vmatpush1.msra.mxu0 0.0
      %605 = vmatprep.subr.mxu0 0.0
      %606 = vmatpush1.msra.mxu0 0.0
      %607 = vmatprep.subr.mxu0 0.0
      %608 = vmatpush1.msra.mxu0 0.0
      %609 = vmatprep.subr.mxu0 0.0
      %610 = vmatpush1.msra.mxu0 0.0
      %611 = vmatprep.subr.mxu0 0.0
      %612 = vmatpush1.msra.mxu0 0.0
      %613 = vmatprep.mubr.f32.mxu0 0.0
      %614 = vmatmul.mubr.f32.gmra.mrb[0].mxu0 %v534
      %v615 = vpop.f32.mrb[0].mxu0
      %v616 = vadd.f32 %v531, %v615
      %v617 = vpop.f32.mrb[0].mxu0
      %618 = vmatprep.mubr.f32.mxu0 0.0
      %619 = vmatmul.mubr.f32.gmra.mrb[0].mxu0 %v537
      %v620 = vpop.f32.mrb[0].mxu0
      %v621 = vadd.f32 %v531, %v620
      %v622 = vpop.f32.mrb[0].mxu0
      %623 = vmatprep.mubr.f32.mxu0 0.0
      %624 = vmatmul.mubr.f32.gmra.mrb[0].mxu0 %v540
      %v625 = vpop.f32.mrb[0].mxu0
      %v626 = vadd.f32 %v531, %v625
      %v627 = vpop.f32.mrb[0].mxu0
      %628 = vmatprep.mubr.f32.mxu0 0.0
      %629 = vmatmul.mubr.f32.gmra.mrb[0].mxu0 %v543
      %v630 = vpop.f32.mrb[0].mxu0
      %v631 = vadd.f32 %v531, %v630
      %v632 = vpop.f32.mrb[0].mxu0
      %633 = vdwg.mxu0
      %vm634 = vcmask 80896
      %v635 = vsel %vm634, %v616, -inf
      %636 = vmax.xlane.f32.xlu0 %v635
      %v637 = vpop.xlane.xlu0 %636
      %v638 = vsel %vm634, %v621, -inf
      %639 = vmax.xlane.f32.xlu0 %v638
      %v640 = vpop.xlane.xlu0 %639
      %v641 = vsel %vm634, %v626, -inf
      %642 = vmax.xlane.f32.xlu0 %v641
      %v643 = vpop.xlane.xlu0 %642
      %v644 = vsel %vm634, %v631, -inf
      %645 = vmax.xlane.f32.xlu0 %v644
      %v646 = vpop.xlane.xlu0 %645
      %v647 = vsub.f32 %v616, %v637
      %v648 = vsub.f32 %v621, %v640
      %v649 = vsub.f32 %v626, %v643
      %v650 = vsub.f32 %v631, %v646
      %v651 = vmul.f32 %v647, 1.442695
      %v652 = vpow.pop %v651
      %v653 = vmul.f32 %v648, 1.442695
      %v654 = vpow.pop %v653
      %v655 = vmul.f32 %v649, 1.442695
      %v656 = vpow.pop %v655
      %v657 = vmul.f32 %v650, 1.442695
      %v658 = vpow.pop %v657
      %v659 = vsel %vm634, %v652, 0.0
      %660 = vadd.xlane.f32.xlu0 %v659
      %v661 = vpop.xlane.xlu0 %660
      %v662 = vsel %vm634, %v654, 0.0
      %663 = vadd.xlane.f32.xlu0 %v662
      %v664 = vpop.xlane.xlu0 %663
      %v665 = vsel %vm634, %v656, 0.0
      %666 = vadd.xlane.f32.xlu0 %v665
      %v667 = vpop.xlane.xlu0 %666
      %v668 = vsel %vm634, %v658, 0.0
      %669 = vadd.xlane.f32.xlu0 %v668
      %v670 = vpop.xlane.xlu0 %669
      %v671 = vrcp.pop %v661
      %v672 = vrcp.pop %v664
      %v673 = vrcp.pop %v667
      %v674 = vrcp.pop %v670
      %v675 = vmul.f32 %v652, %v671
      %v676 = vmul.f32 %v654, %v672
      %v677 = vmul.f32 %v656, %v673
      %v678 = vmul.f32 %v658, %v674
      %v679 = vpack.c.bf16 %v676, %v675
      %v680 = vpack.c.bf16 %v678, %v677
      %v683 = vunpack.c.l.b16 %v679
      %v684 = vunpack.c.h.b16 %v679
      %v685 = vunpack.c.l.b16 %v680
      %v686 = vunpack.c.h.b16 %v680
      %v687 = vpack.c.b16 %v683, %v683
      %v688 = vpack.c.b16 %v684, %v684
      %v689 = vpack.c.b16 %v685, %v685
      %v690 = vpack.c.b16 %v686, %v686
      %vm695 = vcmask 76800
      %696 = vst.msk [vmem:[%s280] sm:$0xf] %vm695, %v687
      %697 = vst.msk [vmem:[%s280 + $0x4] sm:$0xf] %vm695, %v688
      %698 = vst.msk [vmem:[%s280 + $0x8] sm:$0xf] %vm695, %v689
      %699 = vst.msk [vmem:[%s280 + $0xc] sm:$0xf] %vm695, %v690
      %s700 = smul.u32 4, %s18
      %p701 = scmp.lt.s32.totalorder %s700, 27
      %s702 = scalar_select %p701, %s700, 27
      %s703 = smul.addr %s702, 4
      %s704 = scalar_lea.vmem %s7, %s703
      // Predicated region
      $region49: #{tpu_custom_call.1} parent=47 // pred_check
        %p705 = pneg %p188
      $region50: #{tpu_custom_call.1} parent=47 // pred_check_branch
        %707 = sbr.rel (%p705) target = $region52
      $region51: #{tpu_custom_call.1} parent=47 // pred_region
        %s708 = smul.u32 4, %s18
      $region52: #{tpu_custom_call.1} parent=47 // pred_fallthru
        _
    $region48: #{tpu_custom_call.1} parent=5 // pred_fallthru
      _
    %p709 = scmp.le.s32.totalorder 2, %s13
    // Predicated region
    $region53: #{tpu_custom_call.1} parent=5 // pred_check
      %p710 = pneg %p709
    $region54: #{tpu_custom_call.1} parent=5 // pred_check_branch
      %712 = sbr.rel (%p710) target = $region56
    $region55: #{tpu_custom_call.1} parent=5 // pred_region
      %s713 = ssub.s32 %s13, 2
      // Predicated region
      $region57: #{tpu_custom_call.1} parent=55 // pred_check
        %p714 = pneg %p194
      $region58: #{tpu_custom_call.1} parent=55 // pred_check_branch
        %716 = sbr.rel (%p714) target = $region60
      $region59: #{tpu_custom_call.1} parent=55 // pred_region
        %s717 = smul.u32 4, %s19
        %p718 = scmp.lt.s32.totalorder %s717, 27
        %s719 = scalar_select %p718, %s717, 27
        %s720 = smul.addr %s719, 4
        %s721 = scalar_lea.vmem %s7, %s720
      $region60: #{tpu_custom_call.1} parent=55 // pred_fallthru
        _
    $region56: #{tpu_custom_call.1} parent=5 // pred_fallthru
      _
  $region6: #{tpu_custom_call.1} parent=0 // loop_footer
    %s17 = sadd.s32 1, %s13
  $region7: #{tpu_custom_call.1} parent=0 // loop_footer_branch
    %12 = sbr.rel target = $region3
  $region8: #{tpu_custom_call.1} parent=0 // loop_exit
    _

</llo_original>
